<compile_context>
chip_gen: v6e
topology: v6e:2x2x1
jax: 0.10.0
libtpu: 0.0.40
codegen_flags: <defaults>
</compile_context>

<pallas_src>
import functools

import jax
import jax.numpy as jnp
from jax.experimental import pallas as pl
from jax.experimental.pallas import tpu as pltpu


# ---------------------------------------------------------------------------
# Kernels
# ---------------------------------------------------------------------------

def _fused_kernel(x_ref, w_ref, b_ref, g_ref, bt_ref, o_ref):
    """Common path: whole K fits — one lane-dense matmul per batch block.

    x_ref  : (Bb, N, K)  bf16   lane-dense history rows
    w_ref  : (K, M)      bf16   full fc1 weight (resident, grid-invariant)
    b_ref  : (1, M)      f32    fc1 bias
    g_ref  : (N, M)      f32    HyperMean affine weight (gamma)
    bt_ref : (N, M)      f32    HyperMean affine bias   (beta)
    o_ref  : (Bb, N, M)  f32    output block
    """
    Bb, N, K = x_ref.shape
    M = w_ref.shape[-1]
    # (Bb, N, K) -> (Bb*N, K) is a free view (N is sublane-aligned or Bb == 1).
    y = jnp.dot(x_ref[...].reshape(Bb * N, K), w_ref[...],
                preferred_element_type=jnp.float32).reshape(Bb, N, M)
    y = y + b_ref[...]
    # HyperMean: subtract node mean, then learned affine.
    # TODO(synk): for N >= ~256 move this reduce to the MXU as (ones(1,N)/N) @ y.
    mu = jnp.mean(y, axis=1, keepdims=True)
    o_ref[...] = ((y - mu) * g_ref[...] + bt_ref[...]).astype(o_ref.dtype)


def _fused_kernel_ksplit(x_ref, w_ref, b_ref, g_ref, bt_ref, o_ref):
    """Large-K path: K is split along a trailing 'arbitrary' grid axis.
    o_ref is resident across the K axis (its index map ignores ki), so it doubles
    as the f32 accumulator — no VMEM scratch, no in-register partial carry."""
    ki = pl.program_id(1)
    Bb, N, Kb = x_ref.shape
    M = w_ref.shape[-1]

    @pl.when(ki == 0)
    def _init():
        o_ref[...] = jnp.zeros_like(o_ref)

    o_ref[...] += jnp.dot(x_ref[...].reshape(Bb * N, Kb), w_ref[...],
                          preferred_element_type=jnp.float32).reshape(Bb, N, M)

    @pl.when(ki == pl.num_programs(1) - 1)
    def _finalize():
        y = o_ref[...] + b_ref[...]
        mu = jnp.mean(y, axis=1, keepdims=True)          # node mean
        o_ref[...] = ((y - mu) * g_ref[...] + bt_ref[...]).astype(o_ref.dtype)


# ---------------------------------------------------------------------------
# Generation-aware tuning helpers
# ---------------------------------------------------------------------------

def _round_up(v, m):
    return -(-v // m) * m


def _largest_divisor_at_most(n, cap):
    cap = int(max(1, min(n, cap)))
    for d in range(cap, 0, -1):
        if n % d == 0:
            return d
    return 1


@functools.lru_cache(maxsize=1)
def _tpu_vmem_bytes():
    try:
        info = pltpu.get_tpu_info()
        v = getattr(info, "vmem_capacity_bytes", None)
        if v:
            return int(v)
    except Exception:
        pass
    return 64 << 20          # conservative (v7x physical VMEM)


@functools.lru_cache(maxsize=1)
def _target_rows():
    """MXU row target per matmul: 128 saturates v5e's 4x128x128; 256 for v6e/v7x."""
    try:
        kind = jax.devices()[0].device_kind.lower()
        if "v5 lite" in kind or "v5e" in kind or "v5litepod" in kind:
            return 128
    except Exception:
        pass
    return 256


def _pick_batch_block(B, N, target_rows):
    """Fuse batches so the MXU sees ~target_rows rows per matmul, but only when N is
    bf16-sublane aligned (so the (Bb*N, K) view is free), and keep >=2 parallel grid
    steps whenever B allows it (v7x has 2 TensorCores)."""
    if N % 16 != 0:
        bb = 1
    else:
        bb = _largest_divisor_at_most(B, max(1, target_rows // N))
    if B >= 2:
        bb = min(bb, _largest_divisor_at_most(B, max(1, B // 2)))
    # TODO(synk): for B == 1 on v7x (2 TCs) add a parallel split over M (per-column
    #             independent under the node-mean) so both cores get work.
    return max(1, bb)


def _pick_k_block(Bb, N, K, M, vmem_cap):
    """Return Kb (== K means 'no reduction axis').  Only split when the full-K x block
    would blow the per-block budget AND K is 128-splittable."""
    x_budget = min(16 << 20, vmem_cap // 10)          # ~12.8 MiB v5e/v6e, ~6.4 MiB v7x
    row_bytes = Bb * _round_up(N, 16) * 2             # bf16
    if row_bytes * _round_up(K, 128) <= x_budget or K % 128 != 0 or K <= 256:
        # TODO(synk): ragged K that is both huge and not 128-splittable falls back to
        #             full-K; add Element-padding if that case ever shows up.
        return K
    cap_cols = max(128, (x_budget // row_bytes) // 128 * 128)
    kb = cap_cols
    while kb >= 128:
        if K % kb == 0:
            return kb
        kb -= 128
    return K


def _vmem_limit_bytes(Bb, N, Kb, M, vmem_cap):
    """Padded block bytes x pipeline-buffer count, counted exactly once, + headroom."""
    xb = Bb * _round_up(N, 16) * _round_up(Kb, 128) * 2          # bf16
    wb = _round_up(Kb, 16) * _round_up(M, 128) * 2               # bf16
    ob = Bb * _round_up(N, 8) * _round_up(M, 128) * 4            # f32
    small = (8 + 2 * _round_up(N, 8)) * _round_up(M, 128) * 4    # bias, gamma, beta
    est = 2 * (xb + wb + ob + small) + (4 << 20)                 # 2x pipeline buffers + headroom
    return int(min(max(est, 16 << 20), vmem_cap * 3 // 4))


# ---------------------------------------------------------------------------
# Wrapper
# ---------------------------------------------------------------------------

@functools.partial(jax.jit, static_argnums=(5, 6))
def lr_hypermean_forward(long_history, W, b, gamma, beta, prediction_seq_len, output_dim):
    """long_history: (B, L, N, C_in); W: (L*C_in, P*C_out); b: (P*C_out,);
    gamma/beta: (1, P, N, C_out).  Returns (B, P, N, C_out)."""
    B, L, N, Cin = long_history.shape
    P, Cout = prediction_seq_len, output_dim
    K = L * Cin
    M = P * Cout
    assert W.shape == (K, M)
    assert gamma.shape[0] == 1 and beta.shape[0] == 1   # affine is not per-batch

    # Lane-dense contraction layout: fold the transpose into the (already required)
    # bf16 cast -> one fused XLA pass over the input, K = L*Cin on the lane axis.
    x_bf = jnp.transpose(long_history, (0, 2, 1, 3)).reshape(B, N, K).astype(jnp.bfloat16)
    w_bf = W.astype(jnp.bfloat16)                       # (l, c) row order == torch flatten
    b2 = jnp.asarray(b, jnp.float32).reshape(1, M)
    g2 = jnp.transpose(gamma.reshape(P, N, Cout), (1, 0, 2)).reshape(N, M).astype(jnp.float32)
    bt2 = jnp.transpose(beta.reshape(P, N, Cout), (1, 0, 2)).reshape(N, M).astype(jnp.float32)

    vmem_cap = _tpu_vmem_bytes()
    Bb = _pick_batch_block(B, N, _target_rows())
    Kb = _pick_k_block(Bb, N, K, M, vmem_cap)
    assert B % Bb == 0 and K % Kb == 0, "block pickers must return exact divisors"

    if Kb == K:
        # Common case: W resident, no reduction axis, no accumulator, no init/finalize.
        grid = (B // Bb,)
        kernel = _fused_kernel
        in_specs = [
            pl.BlockSpec((Bb, N, K), lambda bi: (bi, 0, 0)),   # x (streamed, lane-dense)
            pl.BlockSpec((K, M), lambda bi: (0, 0)),           # fc1 W (grid-invariant)
            pl.BlockSpec((1, M), lambda bi: (0, 0)),           # fc1 bias
            pl.BlockSpec((N, M), lambda bi: (0, 0)),           # HyperMean gamma
            pl.BlockSpec((N, M), lambda bi: (0, 0)),           # HyperMean beta
        ]
        out_specs = pl.BlockSpec((Bb, N, M), lambda bi: (bi, 0, 0))
        dims = ("parallel",)
    else:
        # Large-K path: reduction axis last, accumulate directly into o_ref.
        grid = (B // Bb, K // Kb)
        kernel = _fused_kernel_ksplit
        in_specs = [
            pl.BlockSpec((Bb, N, Kb), lambda bi, ki: (bi, 0, ki)),
            pl.BlockSpec((Kb, M), lambda bi, ki: (ki, 0)),
            pl.BlockSpec((1, M), lambda bi, ki: (0, 0)),
            pl.BlockSpec((N, M), lambda bi, ki: (0, 0)),
            pl.BlockSpec((N, M), lambda bi, ki: (0, 0)),
        ]
        out_specs = pl.BlockSpec((Bb, N, M), lambda bi, ki: (bi, 0, 0))
        dims = ("parallel", "arbitrary")

    out = pl.pallas_call(
        kernel,
        out_shape=jax.ShapeDtypeStruct((B, N, M), jnp.float32),
        grid_spec=pltpu.PrefetchScalarGridSpec(
            num_scalar_prefetch=0,
            grid=grid,
            in_specs=in_specs,
            out_specs=out_specs,
        ),
        compiler_params=pltpu.CompilerParams(
            dimension_semantics=dims,
            vmem_limit_bytes=_vmem_limit_bytes(Bb, N, Kb, M, vmem_cap),
        ),
    )(x_bf, w_bf, b2, g2, bt2)

    # (B, N, P*C_out) -> (B, N, P, C_out) -> (B, P, N, C_out), i.e. .view().transpose(1,2).
    return jnp.transpose(out.reshape(B, N, P, Cout), (0, 2, 1, 3))


def reference_forward(long_history, W, b, gamma, beta, P, Cout):
    """Pure-JAX reference mirroring the PyTorch forward (same bf16 matmul inputs /
    f32 accumulation as the kernel, so the comparison is tight)."""
    B, L, N, Cin = long_history.shape
    x = jnp.transpose(long_history, (0, 2, 1, 3)).reshape(B, N, L * Cin).astype(jnp.bfloat16)
    y = jnp.einsum("bnk,km->bnm", x, W.astype(jnp.bfloat16),
                   preferred_element_type=jnp.float32) + b
    pred = jnp.transpose(y.reshape(B, N, P, Cout), (0, 2, 1, 3))    # (B, P, N, Cout)
    mu = pred.mean(axis=2, keepdims=True)                           # HyperMean: node mean
    return (pred - mu) * gamma + beta


if __name__ == "__main__":
    # Small shapes consistent with the module's forward.
    batch = 4
    history_seq_len = 8       # L
    input_dim = 4             # C_in
    prediction_seq_len = 8    # P
    output_dim = 4            # C_out
    num_nodes = 16            # N

    K = history_seq_len * input_dim
    M = prediction_seq_len * output_dim

    key = jax.random.PRNGKey(0)
    k_x, k_w, k_b, k_g, k_bt = jax.random.split(key, 5)

    long_history_data = jax.random.normal(
        k_x, (batch, history_seq_len, num_nodes, input_dim), dtype=jnp.float32)
    W = jax.random.normal(k_w, (K, M), dtype=jnp.float32) / jnp.sqrt(K)
    b = jax.random.normal(k_b, (M,), dtype=jnp.float32) * 0.01
    gamma = 1.0 + 0.1 * jax.random.normal(
        k_g, (1, prediction_seq_len, num_nodes, output_dim), dtype=jnp.float32)
    beta = 0.1 * jax.random.normal(
        k_bt, (1, prediction_seq_len, num_nodes, output_dim), dtype=jnp.float32)

    out = lr_hypermean_forward(long_history_data, W, b, gamma, beta,
                               prediction_seq_len, output_dim)
    out = jax.block_until_ready(out)

    ref = reference_forward(long_history_data, W, b, gamma, beta,
                            prediction_seq_len, output_dim)
    assert out.shape == (batch, prediction_seq_len, num_nodes, output_dim)
    assert jnp.allclose(out, ref, atol=2e-3, rtol=2e-3), "mismatch vs pure-JAX reference"

    print("KERNEL_OK")
</pallas_src>

<mosaic_0001>
module attributes {stable_mosaic.version = 11 : i64} {
  func.func @_fused_kernel(%arg0: i32, %arg1: memref<2x16x32xbf16, #tpu.memory_space<vmem>>, %arg2: memref<32x32xbf16, #tpu.memory_space<vmem>>, %arg3: memref<1x32xf32, #tpu.memory_space<vmem>>, %arg4: memref<16x32xf32, #tpu.memory_space<vmem>>, %arg5: memref<16x32xf32, #tpu.memory_space<vmem>>, %arg6: memref<2x16x32xf32, #tpu.memory_space<vmem>>) attributes {dimension_semantics = [#tpu.dimension_semantics<parallel>], iteration_bounds = array<i64: 2>, scalar_prefetch = 0 : i64, scratch_operands = 0 : i64, tpu.core_type = #tpu.core_type<tc>, window_params = [{transform_indices = @transform_0, window_bounds = array<i64: 2, 16, 32>}, {pipeline_mode = #tpu.pipeline_mode<synchronous>, transform_indices = @transform_1, window_bounds = array<i64: 32, 32>}, {pipeline_mode = #tpu.pipeline_mode<synchronous>, transform_indices = @transform_2, window_bounds = array<i64: 1, 32>}, {pipeline_mode = #tpu.pipeline_mode<synchronous>, transform_indices = @transform_3, window_bounds = array<i64: 16, 32>}, {pipeline_mode = #tpu.pipeline_mode<synchronous>, transform_indices = @transform_4, window_bounds = array<i64: 16, 32>}, {transform_indices = @transform_5, window_bounds = array<i64: 2, 16, 32>}]} {
    %c0 = arith.constant 0 : index
    %c0_0 = arith.constant 0 : index
    %c0_1 = arith.constant 0 : index
    %0 = vector.load %arg1[%c0, %c0_0, %c0_1] : memref<2x16x32xbf16, #tpu.memory_space<vmem>>, vector<2x16x32xbf16>
    %1 = vector.shape_cast %0 : vector<2x16x32xbf16> to vector<32x32xbf16>
    %c0_2 = arith.constant 0 : index
    %c0_3 = arith.constant 0 : index
    %2 = vector.load %arg2[%c0_2, %c0_3] : memref<32x32xbf16, #tpu.memory_space<vmem>>, vector<32x32xbf16>
    %cst = arith.constant dense<0.000000e+00> : vector<32x32xf32>
    %3 = tpu.matmul %1, %2, %cst {dimension_numbers = #tpu.dot_dimension_numbers<[1], [0], [0], [1], [0, 0, 1, 1], [], []>} : vector<32x32xbf16>, vector<32x32xbf16>, vector<32x32xf32> -> vector<32x32xf32>
    %4 = vector.shape_cast %3 : vector<32x32xf32> to vector<2x16x32xf32>
    %c0_4 = arith.constant 0 : index
    %c0_5 = arith.constant 0 : index
    %5 = vector.load %arg3[%c0_4, %c0_5] : memref<1x32xf32, #tpu.memory_space<vmem>>, vector<1x32xf32>
    %6 = vector.shape_cast %5 : vector<1x32xf32> to vector<1x1x32xf32>
    %7 = vector.broadcast %6 : vector<1x1x32xf32> to vector<2x16x32xf32>
    %8 = arith.addf %4, %7 : vector<2x16x32xf32>
    %cst_6 = arith.constant dense<0.000000e+00> : vector<2x32xf32>
    %9 = vector.multi_reduction <add>, %8, %cst_6 [1] : vector<2x16x32xf32> to vector<2x32xf32>
    %10 = vector.shape_cast %9 : vector<2x32xf32> to vector<2x1x32xf32>
    %cst_7 = arith.constant 1.600000e+01 : f32
    %11 = vector.broadcast %cst_7 : f32 to vector<2x1x32xf32>
    %12 = arith.divf %10, %11 : vector<2x1x32xf32>
    %13 = vector.broadcast %12 : vector<2x1x32xf32> to vector<2x16x32xf32>
    %14 = arith.subf %8, %13 : vector<2x16x32xf32>
    %c0_8 = arith.constant 0 : index
    %c0_9 = arith.constant 0 : index
    %15 = vector.load %arg4[%c0_8, %c0_9] : memref<16x32xf32, #tpu.memory_space<vmem>>, vector<16x32xf32>
    %16 = vector.shape_cast %15 : vector<16x32xf32> to vector<1x16x32xf32>
    %17 = vector.broadcast %16 : vector<1x16x32xf32> to vector<2x16x32xf32>
    %18 = arith.mulf %14, %17 : vector<2x16x32xf32>
    %c0_10 = arith.constant 0 : index
    %c0_11 = arith.constant 0 : index
    %19 = vector.load %arg5[%c0_10, %c0_11] : memref<16x32xf32, #tpu.memory_space<vmem>>, vector<16x32xf32>
    %20 = vector.shape_cast %19 : vector<16x32xf32> to vector<1x16x32xf32>
    %21 = vector.broadcast %20 : vector<1x16x32xf32> to vector<2x16x32xf32>
    %22 = arith.addf %18, %21 : vector<2x16x32xf32>
    %c0_12 = arith.constant 0 : index
    %c0_13 = arith.constant 0 : index
    %c0_14 = arith.constant 0 : index
    %23 = vector.load %arg6[%c0_12, %c0_13, %c0_14] : memref<2x16x32xf32, #tpu.memory_space<vmem>>, vector<2x16x32xf32>
    tpu.vector_store %arg6[%c0_12, %c0_13, %c0_14], %22 {strides = array<i32>} : memref<2x16x32xf32, #tpu.memory_space<vmem>>, vector<2x16x32xf32>,
    return
  }
  func.func @transform_0(%arg0: i32) -> (i32, i32, i32) {
    %c0_i32 = arith.constant 0 : i32
    %c0_i32_0 = arith.constant 0 : i32
    %c0_i32_1 = arith.constant 0 : i32
    return %arg0, %c0_i32, %c0_i32_0 : i32, i32, i32
  }
  func.func @transform_1(%arg0: i32) -> (i32, i32) {
    %c0_i32 = arith.constant 0 : i32
    %c0_i32_0 = arith.constant 0 : i32
    %c0_i32_1 = arith.constant 0 : i32
    return %c0_i32, %c0_i32_0 : i32, i32
  }
  func.func @transform_2(%arg0: i32) -> (i32, i32) {
    %c0_i32 = arith.constant 0 : i32
    %c0_i32_0 = arith.constant 0 : i32
    %c0_i32_1 = arith.constant 0 : i32
    return %c0_i32, %c0_i32_0 : i32, i32
  }
  func.func @transform_3(%arg0: i32) -> (i32, i32) {
    %c0_i32 = arith.constant 0 : i32
    %c0_i32_0 = arith.constant 0 : i32
    %c0_i32_1 = arith.constant 0 : i32
    return %c0_i32, %c0_i32_0 : i32, i32
  }
  func.func @transform_4(%arg0: i32) -> (i32, i32) {
    %c0_i32 = arith.constant 0 : i32
    %c0_i32_0 = arith.constant 0 : i32
    %c0_i32_1 = arith.constant 0 : i32
    return %c0_i32, %c0_i32_0 : i32, i32
  }
  func.func @transform_5(%arg0: i32) -> (i32, i32, i32) {
    %c0_i32 = arith.constant 0 : i32
    %c0_i32_0 = arith.constant 0 : i32
    %c0_i32_1 = arith.constant 0 : i32
    return %arg0, %c0_i32, %c0_i32_0 : i32, i32, i32
  }
}

</mosaic_0001>

<llo_original>
// kernel: lr_hypermean_forward.1
$region0: #{lr_hypermean_forward.1}
  #allocation0 [shape = 'u32[]', space=smem, size = 0x4, offset = 0x4, fixed_abs, tag = 'smem constant byte address 0x4 - core index']
  #allocation1 [shape = 'u32[144,128]{1,0:T(1,128)}', space=vmem, size = 0x12000, scoped, tag = 'internal scratch']
  %s0 = inlined_call_operand.vmem [shape: bf16[4,16,32], index: 0, kind: input, shape index: {}]
  %s1 = inlined_call_operand.vmem [shape: bf16[32,32], index: 1, kind: input, shape index: {}]
  %s2 = inlined_call_operand.vmem [shape: f32[1,32], index: 2, kind: input, shape index: {}]
  %s3 = inlined_call_operand.vmem [shape: f32[16,32], index: 3, kind: input, shape index: {}]
  %s4 = inlined_call_operand.vmem [shape: f32[16,32], index: 4, kind: input, shape index: {}]
  %s5 = inlined_call_operand.vmem [shape: f32[4,16,32], index: 5, kind: output, shape index: {}]
  %s6 = sld [smem:[#allocation0]]
  $region53: #{lr_hypermean_forward.1} parent=0
    _
  %s8 = ssub.s32 1, %s6
  %s9 = scalar_select 0, %s8, %s6
  loop: start=0, step=1, limit=4
  $region2: #{lr_hypermean_forward.1} parent=0 // loop_pre_header
    _
  $region3: #{lr_hypermean_forward.1} parent=0 // loop_header
    %s11 = sphi 0, %s15
    %p12 = scmp.ge.s32.totalorder %s11, 4
    %s21 = sphi 0, %s23
    %s24 = sphi 0, %s21
    %s25 = sphi 0, %s24
    %s41 = sphi 0, %s25
    %s45 = sphi 0, %s45
    %s47 = sphi 0, %s45
    %s48 = sphi 0, %s47
    %s62 = sphi 0, %s48
    %s66 = sphi 0, %s66
    %s68 = sphi 0, %s66
    %s69 = sphi 0, %s68
    %s83 = sphi 0, %s69
    %s87 = sphi 0, %s87
    %s89 = sphi 0, %s87
    %s90 = sphi 0, %s89
    %s104 = sphi 0, %s90
    %s108 = sphi 0, %s108
    %s110 = sphi 0, %s108
    %s111 = sphi 0, %s110
    %s125 = sphi 0, %s111
    %s131 = sphi 0, %s133
    %s134 = sphi 0, %s131
    %s135 = sphi 0, %s134
    %s151 = sphi 0, %s135
  $region4: #{lr_hypermean_forward.1} parent=0 // loop_header_branch
    %14 = sbr.rel (%p12) target = $region8
  $region5: #{lr_hypermean_forward.1} parent=0 // loop_body
    %s16 = ssub.s32 %s11, 1
    %s17 = ssub.s32 %s11, 2
    %s18 = sadd.s32 %s11, 1
    %s19 = ssub.s32 %s11, %s18
    %p20 = scmp.eq.s32.totalorder %s19, 0
    %s22 = sadd.s32 %s21, 1
    %s23 = scalar_select %p20, %s21, %s22
    %p26 = pneg %p20
    %p27 = scmp.eq.s32.totalorder %s11, 1
    %p28 = por %p26, %p27
    %p29 = scmp.ne.s32.totalorder %s21, %s24
    %p30 = scmp.eq.s32.totalorder %s11, 0
    %p31 = por %p29, %p30
    %p32 = scmp.ne.s32.totalorder %s21, %s24
    %p33 = scmp.eq.s32.totalorder %s16, 1
    %p34 = por %p32, %p33
    %p35 = scmp.ne.s32.totalorder %s24, %s25
    %p36 = scmp.eq.s32.totalorder %s16, 0
    %p37 = por %p35, %p36
    %p38 = scmp.ne.s32.totalorder %s24, %s25
    %p39 = scmp.eq.s32.totalorder %s17, 1
    %p40 = por %p38, %p39
    %p42 = scmp.ne.s32.totalorder %s25, %s41
    %p43 = scmp.eq.s32.totalorder %s17, 0
    %p44 = por %p42, %p43
    %s46 = sadd.s32 %s45, 1
    %p49 = scmp.eq.s32.totalorder %s11, 1
    %p50 = scmp.ne.s32.totalorder %s45, %s47
    %p51 = scmp.eq.s32.totalorder %s11, 0
    %p52 = por %p50, %p51
    %p53 = scmp.ne.s32.totalorder %s45, %s47
    %p54 = scmp.eq.s32.totalorder %s16, 1
    %p55 = por %p53, %p54
    %p56 = scmp.ne.s32.totalorder %s47, %s48
    %p57 = scmp.eq.s32.totalorder %s16, 0
    %p58 = por %p56, %p57
    %p59 = scmp.ne.s32.totalorder %s47, %s48
    %p60 = scmp.eq.s32.totalorder %s17, 1
    %p61 = por %p59, %p60
    %p63 = scmp.ne.s32.totalorder %s48, %s62
    %p64 = scmp.eq.s32.totalorder %s17, 0
    %p65 = por %p63, %p64
    %s67 = sadd.s32 %s66, 1
    %p70 = scmp.eq.s32.totalorder %s11, 1
    %p71 = scmp.ne.s32.totalorder %s66, %s68
    %p72 = scmp.eq.s32.totalorder %s11, 0
    %p73 = por %p71, %p72
    %p74 = scmp.ne.s32.totalorder %s66, %s68
    %p75 = scmp.eq.s32.totalorder %s16, 1
    %p76 = por %p74, %p75
    %p77 = scmp.ne.s32.totalorder %s68, %s69
    %p78 = scmp.eq.s32.totalorder %s16, 0
    %p79 = por %p77, %p78
    %p80 = scmp.ne.s32.totalorder %s68, %s69
    %p81 = scmp.eq.s32.totalorder %s17, 1
    %p82 = por %p80, %p81
    %p84 = scmp.ne.s32.totalorder %s69, %s83
    %p85 = scmp.eq.s32.totalorder %s17, 0
    %p86 = por %p84, %p85
    %s88 = sadd.s32 %s87, 1
    %p91 = scmp.eq.s32.totalorder %s11, 1
    %p92 = scmp.ne.s32.totalorder %s87, %s89
    %p93 = scmp.eq.s32.totalorder %s11, 0
    %p94 = por %p92, %p93
    %p95 = scmp.ne.s32.totalorder %s87, %s89
    %p96 = scmp.eq.s32.totalorder %s16, 1
    %p97 = por %p95, %p96
    %p98 = scmp.ne.s32.totalorder %s89, %s90
    %p99 = scmp.eq.s32.totalorder %s16, 0
    %p100 = por %p98, %p99
    %p101 = scmp.ne.s32.totalorder %s89, %s90
    %p102 = scmp.eq.s32.totalorder %s17, 1
    %p103 = por %p101, %p102
    %p105 = scmp.ne.s32.totalorder %s90, %s104
    %p106 = scmp.eq.s32.totalorder %s17, 0
    %p107 = por %p105, %p106
    %s109 = sadd.s32 %s108, 1
    %p112 = scmp.eq.s32.totalorder %s11, 1
    %p113 = scmp.ne.s32.totalorder %s108, %s110
    %p114 = scmp.eq.s32.totalorder %s11, 0
    %p115 = por %p113, %p114
    %p116 = scmp.ne.s32.totalorder %s108, %s110
    %p117 = scmp.eq.s32.totalorder %s16, 1
    %p118 = por %p116, %p117
    %p119 = scmp.ne.s32.totalorder %s110, %s111
    %p120 = scmp.eq.s32.totalorder %s16, 0
    %p121 = por %p119, %p120
    %p122 = scmp.ne.s32.totalorder %s110, %s111
    %p123 = scmp.eq.s32.totalorder %s17, 1
    %p124 = por %p122, %p123
    %p126 = scmp.ne.s32.totalorder %s111, %s125
    %p127 = scmp.eq.s32.totalorder %s17, 0
    %p128 = por %p126, %p127
    %s129 = ssub.s32 %s11, %s18
    %p130 = scmp.eq.s32.totalorder %s129, 0
    %s132 = sadd.s32 %s131, 1
    %s133 = scalar_select %p130, %s131, %s132
    %p136 = pneg %p130
    %p137 = scmp.eq.s32.totalorder %s11, 1
    %p138 = por %p136, %p137
    %p139 = scmp.ne.s32.totalorder %s131, %s134
    %p140 = scmp.eq.s32.totalorder %s11, 0
    %p141 = por %p139, %p140
    %p142 = scmp.ne.s32.totalorder %s131, %s134
    %p143 = scmp.eq.s32.totalorder %s16, 1
    %p144 = por %p142, %p143
    %p145 = scmp.ne.s32.totalorder %s134, %s135
    %p146 = scmp.eq.s32.totalorder %s16, 0
    %p147 = por %p145, %p146
    %p148 = scmp.ne.s32.totalorder %s134, %s135
    %p149 = scmp.eq.s32.totalorder %s17, 1
    %p150 = por %p148, %p149
    %p152 = scmp.ne.s32.totalorder %s135, %s151
    %p153 = scmp.eq.s32.totalorder %s17, 0
    %p154 = por %p152, %p153
    %p155 = scmp.le.s32.totalorder 1, %s11
    %p156 = scmp.lt.s32.totalorder %s11, 3
    %p157 = pnand %p155, %p156
    %p158 = pneg %p157
    // Predicated region
    $region9: #{lr_hypermean_forward.1} parent=5 // pred_check
      _
    $region10: #{lr_hypermean_forward.1} parent=5 // pred_check_branch
      %160 = sbr.rel (%p157) target = $region12
    $region11: #{lr_hypermean_forward.1} parent=5 // pred_region
      %s161 = ssub.s32 %s11, 1
      // Predicated region
      $region13: #{lr_hypermean_forward.1} parent=11 // pred_check
        %p162 = pneg %p58
      $region14: #{lr_hypermean_forward.1} parent=11 // pred_check_branch
        %164 = sbr.rel (%p162) target = $region16
      $region15: #{lr_hypermean_forward.1} parent=11 // pred_region
        _
      $region16: #{lr_hypermean_forward.1} parent=11 // pred_fallthru
        _
      // Predicated region
      $region17: #{lr_hypermean_forward.1} parent=11 // pred_check
        %p165 = pneg %p79
      $region18: #{lr_hypermean_forward.1} parent=11 // pred_check_branch
        %167 = sbr.rel (%p165) target = $region20
      $region19: #{lr_hypermean_forward.1} parent=11 // pred_region
        _
      $region20: #{lr_hypermean_forward.1} parent=11 // pred_fallthru
        _
      // Predicated region
      $region21: #{lr_hypermean_forward.1} parent=11 // pred_check
        %p168 = pneg %p100
      $region22: #{lr_hypermean_forward.1} parent=11 // pred_check_branch
        %170 = sbr.rel (%p168) target = $region24
      $region23: #{lr_hypermean_forward.1} parent=11 // pred_region
        _
      $region24: #{lr_hypermean_forward.1} parent=11 // pred_fallthru
        _
      // Predicated region
      $region25: #{lr_hypermean_forward.1} parent=11 // pred_check
        %p171 = pneg %p121
      $region26: #{lr_hypermean_forward.1} parent=11 // pred_check_branch
        %173 = sbr.rel (%p171) target = $region28
      $region27: #{lr_hypermean_forward.1} parent=11 // pred_region
        _
      $region28: #{lr_hypermean_forward.1} parent=11 // pred_fallthru
        _
    $region12: #{lr_hypermean_forward.1} parent=5 // pred_fallthru
      _
    %p174 = scmp.lt.s32.totalorder %s11, 2
    // Predicated region
    $region29: #{lr_hypermean_forward.1} parent=5 // pred_check
      %p175 = pneg %p174
    $region30: #{lr_hypermean_forward.1} parent=5 // pred_check_branch
      %177 = sbr.rel (%p175) target = $region32
    $region31: #{lr_hypermean_forward.1} parent=5 // pred_region
      // Predicated region
      $region33: #{lr_hypermean_forward.1} parent=31 // pred_check
        %p178 = pneg %p31
      $region34: #{lr_hypermean_forward.1} parent=31 // pred_check_branch
        %180 = sbr.rel (%p178) target = $region36
      $region35: #{lr_hypermean_forward.1} parent=31 // pred_region
        %s181 = smul.u32 2, %s11
        %p182 = scmp.lt.s32.totalorder %s181, 3
        %s183 = scalar_select %p182, %s181, 3
        %s184 = smul.addr %s183, 2
        %s185 = smul.addr %s184, 4
        %s186 = scalar_lea.vmem %s0, %s185
        %s187 = smul.u32 2, %s11
      $region36: #{lr_hypermean_forward.1} parent=31 // pred_fallthru
        _
    $region32: #{lr_hypermean_forward.1} parent=5 // pred_fallthru
      _
    %p188 = scmp.le.s32.totalorder 1, %s11
    %p189 = scmp.lt.s32.totalorder %s11, 3
    %p190 = pnand %p188, %p189
    %p191 = pneg %p190
    // Predicated region
    $region37: #{lr_hypermean_forward.1} parent=5 // pred_check
      _
    $region38: #{lr_hypermean_forward.1} parent=5 // pred_check_branch
      %193 = sbr.rel (%p190) target = $region40
    $region39: #{lr_hypermean_forward.1} parent=5 // pred_region
      %s194 = ssub.s32 %s11, 1
      %s195 = smul.u32 2, %s16
      %p196 = scmp.lt.s32.totalorder %s195, 3
      %s197 = scalar_select %p196, %s195, 3
      %s198 = smul.addr %s197, 2
      %s199 = smul.addr %s198, 4
      %s200 = scalar_lea.vmem %s0, %s199
      %p201 = pneg %p37
      %p202 = pneg %p34
      %p203 = pneg %p58
      %p204 = pneg %p55
      %p205 = pneg %p79
      %p206 = pneg %p76
      %p207 = pneg %p100
      %p208 = pneg %p97
      %p209 = pneg %p121
      %p210 = pneg %p118
      %p211 = pneg %p147
      %p212 = pneg %p144
      %s213 = smul.u32 2, %s16
      %p214 = scmp.lt.s32.totalorder %s213, 3
      %s215 = scalar_select %p214, %s213, 3
      %s216 = smul.addr %s215, 2
      %s217 = smul.addr %s216, 8
      %s218 = scalar_lea.vmem %s5, %s217
      %s219 = smul.u32 2, %s16
      %p220 = scmp.lt.s32.totalorder %s219, 3
      %s221 = scalar_select %p220, %s219, 3
      %s222 = smul.addr %s221, 2
      %s223 = smul.addr %s222, 4
      %s224 = scalar_lea.vmem %s0, %s223
      %s225 = smul.u32 2, %s16
      %s226 = smul.u32 2, %s16
      %p227 = scmp.lt.s32.totalorder %s226, 3
      %s228 = scalar_select %p227, %s226, 3
      %s229 = smul.addr %s228, 2
      %s230 = smul.addr %s229, 8
      %s231 = scalar_lea.vmem %s5, %s230
      %s232 = smul.u32 2, %s16
      %v234 = vld [vmem:[%s224] sm:$0xf]
      %v235 = vld [vmem:[%s224 + $0x4] sm:$0xf]
      %v236 = vld [vmem:[%s224 + $0x8] sm:$0xf]
      %v237 = vld [vmem:[%s224 + $0xc] sm:$0xf]
      %v238 = vld [vmem:[%s1] sm:$0xf]
      %v239 = vld [vmem:[%s1 + $0x4] sm:$0xf]
      %v240 = vld [vmem:[%s1 + $0x8] sm:$0xf]
      %v241 = vld [vmem:[%s1 + $0xc] sm:$0xf]
      %v246 = vunpack.c.l.b16 %v234
      %v247 = vunpack.c.l.b16 %v235
      %v248 = vunpack.c.l.b16 %v236
      %v249 = vunpack.c.l.b16 %v237
      %v250 = vpack.c.b16 %v247, %v246
      %v251 = vpack.c.b16 %v249, %v248
      %v256 = vunpack.c.l.b16 %v238
      %v257 = vunpack.c.l.b16 %v239
      %v258 = vunpack.c.l.b16 %v240
      %v259 = vunpack.c.l.b16 %v241
      %v260 = vpack.c.b16 %v257, %v256
      %v261 = vpack.c.b16 %v259, %v258
      %vm264 = vcmask 261120
      %v266 = vsel %vm264, %v250, 0
      %v269 = vsel %vm264, %v251, 0
      %271 = vmatprep.subr.bf16.mxu0 0
      %272 = vmatpush1.bf16.msra.mxu0 0
      %273 = vmatprep.subr.bf16.mxu0 0
      %274 = vmatpush1.bf16.msra.mxu0 0
      %275 = vmatprep.subr.bf16.mxu0 0
      %276 = vmatpush1.bf16.msra.mxu0 0
      %277 = vmatprep.subr.bf16.mxu0 0
      %278 = vmatpush1.bf16.msra.mxu0 0
      %279 = vmatprep.subr.bf16.mxu0 0
      %280 = vmatpush1.bf16.msra.mxu0 0
      %281 = vmatprep.subr.bf16.mxu0 0
      %282 = vmatpush1.bf16.msra.mxu0 0
      %283 = vmatprep.subr.bf16.mxu0 0
      %284 = vmatpush1.bf16.msra.mxu0 %v261
      %285 = vmatprep.subr.bf16.mxu0 0
      %286 = vmatpush1.bf16.msra.mxu0 %v260
      %287 = vmatprep.subr.bf16.mxu0 0
      %288 = vmatpush2.bf16.msra.mxu0 0
      %289 = vmatprep.subr.bf16.mxu0 0
      %290 = vmatpush2.bf16.msra.mxu0 0
      %291 = vmatprep.subr.bf16.mxu0 0
      %292 = vmatpush2.bf16.msra.mxu0 0
      %293 = vmatprep.subr.bf16.mxu0 0
      %294 = vmatpush2.bf16.msra.mxu0 0
      %295 = vmatprep.subr.bf16.mxu0 0
      %296 = vmatpush2.bf16.msra.mxu0 0
      %297 = vmatprep.subr.bf16.mxu0 0
      %298 = vmatpush2.bf16.msra.mxu0 0
      %299 = vmatprep.subr.bf16.mxu0 0
      %300 = vmatpush2.bf16.msra.mxu0 0
      %301 = vmatprep.subr.bf16.mxu0 0
      %302 = vmatpush2.bf16.msra.mxu0 0
      %303 = vmatprep.mubr.bf16.mxu0 0
      %304 = vmatmul.mubr.bf16.gmra.mxu0 %v266
      %v305 = vpop.f32.mrf.mxu0
      %v306 = vadd.f32 0.0, %v305
      %v307 = vpop.f32.mrf.mxu0
      %v308 = vpop.f32.mrf.mxu0
      %v309 = vadd.f32 0.0, %v308
      %v310 = vpop.f32.mrf.mxu0
      %311 = vmatprep.mubr.bf16.mxu0 0
      %312 = vmatmul.mubr.bf16.gmra.mxu0 %v269
      %v313 = vpop.f32.mrf.mxu0
      %v314 = vadd.f32 0.0, %v313
      %v315 = vpop.f32.mrf.mxu0
      %v316 = vpop.f32.mrf.mxu0
      %v317 = vadd.f32 0.0, %v316
      %v318 = vpop.f32.mrf.mxu0
      %319 = vdwg.mxu0
      %v320 = vld [vmem:[%s2] sm:$0x1]
      %v322 = vlaneseq
      %v323 = vshrl.u32 %v322, 7
      %v324 = vsub.s32 0, %v323
      %v325 = vrot.slane %v320, %v324
      %v327 = vadd.f32 %v306, %v325
      %v328 = vadd.f32 %v309, %v325
      %v329 = vadd.f32 %v314, %v325
      %v330 = vadd.f32 %v317, %v325
      %v331 = vsel %vm264, %v327, 0.0
      %v332 = vsel %vm264, %v328, 0.0
      %v333 = vadd.f32 %v331, %v332
      %v334 = vrot.slane %v333, 4
      %v335 = vadd.f32 %v333, %v334
      %v336 = vrot.slane %v335, 2
      %v337 = vadd.f32 %v335, %v336
      %v338 = vrot.slane %v337, 1
      %v339 = vadd.f32 %v337, %v338
      %v340 = vsel %vm264, %v329, 0.0
      %v341 = vsel %vm264, %v330, 0.0
      %v342 = vadd.f32 %v340, %v341
      %v343 = vrot.slane %v342, 4
      %v344 = vadd.f32 %v342, %v343
      %v345 = vrot.slane %v344, 2
      %v346 = vadd.f32 %v344, %v345
      %v347 = vrot.slane %v346, 1
      %v348 = vadd.f32 %v346, %v347
      %v349 = vrcp.pop 16.0
      %v350 = vmul.f32 %v339, %v349
      %v351 = vmul.f32 %v348, %v349
      %v352 = vsub.f32 %v327, %v350
      %v353 = vsub.f32 %v328, %v350
      %v354 = vsub.f32 %v329, %v351
      %v355 = vsub.f32 %v330, %v351
      %v356 = vld [vmem:[%s3] sm:$0xff]
      %v357 = vld [vmem:[%s3 + $0x8] sm:$0xff]
      %v358 = vmul.f32 %v352, %v356
      %v359 = vmul.f32 %v353, %v357
      %v360 = vmul.f32 %v354, %v356
      %v361 = vmul.f32 %v355, %v357
      %v362 = vld [vmem:[%s4] sm:$0xff]
      %v363 = vld [vmem:[%s4 + $0x8] sm:$0xff]
      %v364 = vadd.f32 %v358, %v362
      %v365 = vadd.f32 %v359, %v363
      %v366 = vadd.f32 %v360, %v362
      %v367 = vadd.f32 %v361, %v363
      %368 = vst.msk [vmem:[%s231] sm:$0xff] %vm264, %v364
      %369 = vst.msk [vmem:[%s231 + $0x8] sm:$0xff] %vm264, %v365
      %370 = vst.msk [vmem:[%s231 + $0x10] sm:$0xff] %vm264, %v366
      %371 = vst.msk [vmem:[%s231 + $0x18] sm:$0xff] %vm264, %v367
      %s372 = smul.u32 2, %s16
      %p373 = scmp.lt.s32.totalorder %s372, 3
      %s374 = scalar_select %p373, %s372, 3
      %s375 = smul.addr %s374, 2
      %s376 = smul.addr %s375, 8
      %s377 = scalar_lea.vmem %s5, %s376
      // Predicated region
      $region41: #{lr_hypermean_forward.1} parent=39 // pred_check
        %p378 = pneg %p144
      $region42: #{lr_hypermean_forward.1} parent=39 // pred_check_branch
        %380 = sbr.rel (%p378) target = $region44
      $region43: #{lr_hypermean_forward.1} parent=39 // pred_region
        %s381 = smul.u32 2, %s16
      $region44: #{lr_hypermean_forward.1} parent=39 // pred_fallthru
        _
    $region40: #{lr_hypermean_forward.1} parent=5 // pred_fallthru
      _
    %p382 = scmp.le.s32.totalorder 2, %s11
    // Predicated region
    $region45: #{lr_hypermean_forward.1} parent=5 // pred_check
      %p383 = pneg %p382
    $region46: #{lr_hypermean_forward.1} parent=5 // pred_check_branch
      %385 = sbr.rel (%p383) target = $region48
    $region47: #{lr_hypermean_forward.1} parent=5 // pred_region
      %s386 = ssub.s32 %s11, 2
      // Predicated region
      $region49: #{lr_hypermean_forward.1} parent=47 // pred_check
        %p387 = pneg %p150
      $region50: #{lr_hypermean_forward.1} parent=47 // pred_check_branch
        %389 = sbr.rel (%p387) target = $region52
      $region51: #{lr_hypermean_forward.1} parent=47 // pred_region
        %s390 = smul.u32 2, %s17
        %p391 = scmp.lt.s32.totalorder %s390, 3
        %s392 = scalar_select %p391, %s390, 3
        %s393 = smul.addr %s392, 2
        %s394 = smul.addr %s393, 8
        %s395 = scalar_lea.vmem %s5, %s394
      $region52: #{lr_hypermean_forward.1} parent=47 // pred_fallthru
        _
    $region48: #{lr_hypermean_forward.1} parent=5 // pred_fallthru
      _
  $region6: #{lr_hypermean_forward.1} parent=0 // loop_footer
    %s15 = sadd.s32 1, %s11
  $region7: #{lr_hypermean_forward.1} parent=0 // loop_footer_branch
    %10 = sbr.rel target = $region3
  $region8: #{lr_hypermean_forward.1} parent=0 // loop_exit
    _

</llo_original>
